<compile_context>
chip_gen: v7x
topology: tpu7x:2x2x1
jax: 0.10.0
libtpu: 0.0.40
codegen_flags: <defaults>
</compile_context>

<pallas_src>
import numpy as np
import jax
import jax.numpy as jnp
from jax.experimental import pallas as pl
from jax.experimental.pallas import tpu as pltpu

SUBLANE = 8  # TPU vreg sublane count (f32)


def _round_up(n, m):
    return ((n + m - 1) // m) * m


# ----------------------------- mask construction (plain numpy glue) ----------

def get_weight_mask(dim_in, dim_out, num_blocks):
    assert dim_in % num_blocks == 0 and dim_out % num_blocks == 0
    step_in, step_out = dim_in // num_blocks, dim_out // num_blocks
    row_block = np.arange(dim_out) // step_out        # (dim_out,)
    col_block = np.arange(dim_in) // step_in          # (dim_in,)
    mask_d = (row_block[:, None] == col_block[None, :]).astype(np.float32)
    mask_o = (col_block[None, :] < row_block[:, None]).astype(np.float32)
    return mask_d, mask_o                             # (dim_out, dim_in) each


# ----------------------------- Pallas kernel ----------------------------------

def _stable_asinh(y):
    # asinh(y) = sign(y) * log(|y| + sqrt(y^2 + 1)) -- stable for large |y|.
    # The squared term is clamped so a*a never overflows to inf (for |y| beyond
    # ~3e18 this only loses up to log(2) absolute, in a regime where the final
    # sinh overflows anyway).
    a = jnp.abs(y)
    a_sq = jnp.minimum(a, 3.0e18)
    r = jnp.log(a + jnp.sqrt(a_sq * a_sq + 1.0))
    return jnp.where(y >= 0, r, -r)


def _sinh(z):
    # Two EUP exps: same EUP cost as exp + approx-reciprocal but without the
    # ~2^-12 reciprocal error that would dominate for small z.
    return 0.5 * (jnp.exp(z) - jnp.exp(-z))


def masked_mlp_kernel(x_ref, w1_ref, aux1_ref, w2_ref, b2_ref, out_ref):
    """One batch tile of the full 2-layer masked MLP.

    x_ref:    (TM, D)  input tile                      (matmul dtype)
    w1_ref:   (D,  H)  pre-masked W1, (in, out)        (matmul dtype)
    aux1_ref: (3,  H)  rows = [b1, exp(tail), exp(tail)*skew]   (f32)
    w2_ref:   (H,  D)  pre-masked W2, (in, out)        (matmul dtype)
    b2_ref:   (1,  D)  output bias                     (f32)
    out_ref:  (TM, D)  output tile (f32 or bf16)
    """
    # ---- hidden layer: masked linear + SinhArcsinh activation (f32 math) ----
    y = jnp.dot(x_ref[...], w1_ref[...], preferred_element_type=jnp.float32)
    aux = aux1_ref[...]
    y = y + aux[0:1, :]                                   # + b1
    z = aux[2:3, :] + aux[1:2, :] * _stable_asinh(y)      # exp(tail)*skew + exp(tail)*asinh(y)
    h = _sinh(z)                                          # (TM, H), f32

    # ---- output layer: masked linear, no activation ----
    out = jnp.dot(h.astype(w2_ref.dtype), w2_ref[...],
                  preferred_element_type=jnp.float32)
    out_ref[...] = (out + b2_ref[...]).astype(out_ref.dtype)


# ----------------------------- wrapper -----------------------------------------

def masked_mlp_forward(x, prep, *, block_rows=2048, out_dtype=jnp.float32):
    """x: (B, D).  prep: output of prepare_params().

    Streams x/out in `block_rows`-row (unpadded, D-wide) tiles over a 1-D
    batch grid; the tiny masked weights stay VMEM-resident (constant
    index_map).  With D=16/H=128 even TM=8192 is only a few MB of VMEM, well
    under v7x's 32 MiB scoped default.
    """
    B, D = x.shape
    H = prep["H"]
    mm_dtype = prep["w1t"].dtype
    out_dtype = jnp.dtype(out_dtype)

    # No-op if x already arrives in the matmul dtype (ideal: producer emits bf16).
    x = x.astype(mm_dtype)

    TM = min(_round_up(block_rows, SUBLANE), max(SUBLANE, _round_up(B, SUBLANE)))
    grid = (pl.cdiv(B, TM),)

    cost = pl.CostEstimate(
        flops=4 * B * D * H,                       # two (B,D,H) matmuls
        transcendentals=4 * B * H,                 # sqrt + log + 2 exps per hidden elem
        bytes_accessed=(B * D * (jnp.dtype(mm_dtype).itemsize + out_dtype.itemsize)
                        + 2 * D * H * jnp.dtype(mm_dtype).itemsize
                        + 3 * H * 4 + D * 4),
    )

    out = pl.pallas_call(
        masked_mlp_kernel,
        out_shape=jax.ShapeDtypeStruct((B, D), out_dtype),
        grid=grid,
        in_specs=[
            pl.BlockSpec((TM, D), lambda i: (i, 0)),   # x: streams over batch tiles
            pl.BlockSpec((D, H),  lambda i: (0, 0)),   # W1: resident across grid
            pl.BlockSpec((3, H),  lambda i: (0, 0)),   # [b1, exp(tail), exp(tail)*skew]
            pl.BlockSpec((H, D),  lambda i: (0, 0)),   # W2: resident across grid
            pl.BlockSpec((1, D),  lambda i: (0, 0)),   # b2
        ],
        out_specs=pl.BlockSpec((TM, D), lambda i: (i, 0)),
        # v7x: 2 TCs may split the batch axis; on v5e/v6e this is a no-op.
        # (If a v7x trace shows a single busy TC, switch this axis to
        #  pltpu.CORE_PARALLEL or an explicit pl.core_map.)
        compiler_params=pltpu.CompilerParams(
            dimension_semantics=("parallel",)),
        cost_estimate=cost,
    )(x, prep["w1t"], prep["aux1"], prep["w2t"], prep["b2"])

    return out


# ----------------------------- parameter init / prep ---------------------------

def init_raw_params(nmat, ndim, alpha, key):
    """Raw parameters exactly as the PyTorch module holds them."""
    nboson = ndim * (nmat * nmat - 1)
    D, H = nboson, nboson * alpha[0]
    num_blocks = nboson

    k1, k2, k3, k4, k5, k6 = jax.random.split(key, 6)
    s1 = np.sqrt(2.0 / (H + D))
    s2 = np.sqrt(2.0 / (D + H))
    md1, mo1 = get_weight_mask(D, H, num_blocks)      # (H, D)
    md2, mo2 = get_weight_mask(H, D, num_blocks)      # (D, H)

    raw = dict(
        w1=jax.random.normal(k1, (H, D), jnp.float32) * s1,   # (out, in)
        b1=jax.random.normal(k2, (H,), jnp.float32) * s1,
        tail=jax.random.normal(k3, (H,), jnp.float32) * 0.1,
        skew=jax.random.normal(k4, (H,), jnp.float32) * 0.1,
        w2=jax.random.normal(k5, (D, H), jnp.float32) * s2,    # (out, in)
        b2=jax.random.normal(k6, (D,), jnp.float32) * s2,
        md1=jnp.asarray(md1), mo1=jnp.asarray(mo1),
        md2=jnp.asarray(md2), mo2=jnp.asarray(mo2),
    )
    return raw, D, H


def prepare_params(raw, D, H, matmul_dtype=jnp.bfloat16):
    """Hoist all x-independent work out of the kernel (run once per param set):
       masked-weight materialization (exp only on diag-block entries so a huge
       off-block weight can't produce inf*0), transpose to (in, out) with NO
       padding, precompute exp(tail) and exp(tail)*skew, pack them with b1 into
       one (3, H) slab.  Matmul operands default to bf16 (f32 accumulation);
       pass jnp.float32 when bit-exactness vs. the module matters."""
    mw1 = jnp.where(raw["md1"] > 0, jnp.exp(raw["w1"]), raw["w1"] * raw["mo1"])  # (H, D)
    mw2 = jnp.where(raw["md2"] > 0, jnp.exp(raw["w2"]), raw["w2"] * raw["mo2"])  # (D, H)

    w1t = mw1.T.astype(matmul_dtype)                   # (D, H)
    w2t = mw2.T.astype(matmul_dtype)                   # (H, D)

    t = jnp.exp(raw["tail"])
    aux1 = jnp.stack([raw["b1"], t, t * raw["skew"]], axis=0).astype(jnp.float32)  # (3, H)
    b2 = raw["b2"].reshape(1, D).astype(jnp.float32)

    return dict(D=D, H=H, w1t=w1t, w2t=w2t, aux1=aux1, b2=b2)


# ----------------------------- pure-JAX reference ------------------------------

def reference_forward(x, raw, matmul_dtype=jnp.float32):
    """Mirrors the PyTorch module (f32); with matmul_dtype=bfloat16 it applies
    the same operand casts as the kernel (f32 accumulation) for comparison."""
    dt = matmul_dtype
    mw1 = jnp.exp(raw["w1"]) * raw["md1"] + raw["w1"] * raw["mo1"]   # (H, D)
    y = jnp.dot(x.astype(dt), mw1.T.astype(dt),
                preferred_element_type=jnp.float32) + raw["b1"]
    h = jnp.sinh(jnp.exp(raw["tail"]) * (raw["skew"] + jnp.arcsinh(y)))
    mw2 = jnp.exp(raw["w2"]) * raw["md2"] + raw["w2"] * raw["mo2"]   # (D, H)
    return jnp.dot(h.astype(dt), mw2.T.astype(dt),
                   preferred_element_type=jnp.float32) + raw["b2"]


# ----------------------------- main --------------------------------------------

if __name__ == "__main__":
    nmat, ndim, alpha = 3, 2, [8]          # nboson = 16 -> D = 16, H = 128
    key = jax.random.PRNGKey(0)
    kp, kx1, kx2 = jax.random.split(key, 3)
    raw, D, H = init_raw_params(nmat, ndim, alpha, kp)

    # --- small batch, f32 matmuls (matches original module semantics) ---
    prep_f32 = prepare_params(raw, D, H, matmul_dtype=jnp.float32)
    x_small = jax.random.normal(kx1, (8, D), jnp.float32)
    out_small = jax.block_until_ready(masked_mlp_forward(x_small, prep_f32))
    ref_small = reference_forward(x_small, raw)
    np.testing.assert_allclose(np.asarray(out_small), np.asarray(ref_small),
                               rtol=2e-3, atol=2e-3)

    # --- larger batch: exercises the batch-tiled grid (4 tiles of 256 rows) ---
    x_big = jax.random.normal(kx2, (1024, D), jnp.float32)
    out_big = jax.block_until_ready(
        masked_mlp_forward(x_big, prep_f32, block_rows=256))
    ref_big = reference_forward(x_big, raw)
    np.testing.assert_allclose(np.asarray(out_big), np.asarray(ref_big),
                               rtol=5e-3, atol=5e-3)

    # --- bf16 matmul operands (default): half the x HBM stream, full MXU rate
    #     on v6e/v7x; f32 accumulation.  Compared against a reference applying
    #     identical casts. ---
    prep_bf16 = prepare_params(raw, D, H)   # bf16 by default
    out_bf16 = jax.block_until_ready(
        masked_mlp_forward(x_big, prep_bf16, block_rows=512))
    ref_bf16 = reference_forward(x_big, raw, matmul_dtype=jnp.bfloat16)
    np.testing.assert_allclose(np.asarray(out_bf16), np.asarray(ref_bf16),
                               rtol=1e-2, atol=1e-2)

    # --- bf16 output stream (if downstream consumers allow): halves the
    #     remaining HBM traffic. ---
    out_bf16o = jax.block_until_ready(
        masked_mlp_forward(x_big, prep_bf16, block_rows=512,
                           out_dtype=jnp.bfloat16))
    np.testing.assert_allclose(np.asarray(out_bf16o.astype(jnp.float32)),
                               np.asarray(ref_bf16), rtol=3e-2, atol=3e-2)

    print("KERNEL_OK")
</pallas_src>

<mosaic_0001>
module attributes {stable_mosaic.version = 11 : i64} {
  func.func @masked_mlp_kernel(%arg0: i32, %arg1: memref<8x16xf32, #tpu.memory_space<vmem>>, %arg2: memref<16x128xf32, #tpu.memory_space<vmem>>, %arg3: memref<3x128xf32, #tpu.memory_space<vmem>>, %arg4: memref<128x16xf32, #tpu.memory_space<vmem>>, %arg5: memref<1x16xf32, #tpu.memory_space<vmem>>, %arg6: memref<8x16xf32, #tpu.memory_space<vmem>>) attributes {dimension_semantics = [#tpu.dimension_semantics<parallel>], iteration_bounds = array<i64: 1>, scalar_prefetch = 0 : i64, scratch_operands = 0 : i64, tpu.core_type = #tpu.core_type<tc>, window_params = [{transform_indices = @transform_0, window_bounds = array<i64: 8, 16>}, {pipeline_mode = #tpu.pipeline_mode<synchronous>, transform_indices = @transform_1, window_bounds = array<i64: 16, 128>}, {pipeline_mode = #tpu.pipeline_mode<synchronous>, transform_indices = @transform_2, window_bounds = array<i64: 3, 128>}, {pipeline_mode = #tpu.pipeline_mode<synchronous>, transform_indices = @transform_3, window_bounds = array<i64: 128, 16>}, {pipeline_mode = #tpu.pipeline_mode<synchronous>, transform_indices = @transform_4, window_bounds = array<i64: 1, 16>}, {transform_indices = @transform_5, window_bounds = array<i64: 8, 16>}]} {
    %c0 = arith.constant 0 : index
    %c0_0 = arith.constant 0 : index
    %0 = vector.load %arg1[%c0, %c0_0] : memref<8x16xf32, #tpu.memory_space<vmem>>, vector<8x16xf32>
    %c0_1 = arith.constant 0 : index
    %c0_2 = arith.constant 0 : index
    %1 = vector.load %arg2[%c0_1, %c0_2] : memref<16x128xf32, #tpu.memory_space<vmem>>, vector<16x128xf32>
    %cst = arith.constant dense<0.000000e+00> : vector<8x128xf32>
    %2 = tpu.matmul %0, %1, %cst {dimension_numbers = #tpu.dot_dimension_numbers<[1], [0], [0], [1], [0, 0, 1, 1], [], []>} : vector<8x16xf32>, vector<16x128xf32>, vector<8x128xf32> -> vector<8x128xf32>
    %c0_3 = arith.constant 0 : index
    %c0_4 = arith.constant 0 : index
    %3 = vector.load %arg3[%c0_3, %c0_4] : memref<3x128xf32, #tpu.memory_space<vmem>>, vector<3x128xf32>
    %4 = vector.extract_strided_slice %3 {offsets = [0, 0], sizes = [1, 128], strides = [1, 1]} : vector<3x128xf32> to vector<1x128xf32>
    %5 = vector.broadcast %4 : vector<1x128xf32> to vector<8x128xf32>
    %6 = arith.addf %2, %5 : vector<8x128xf32>
    %7 = vector.extract_strided_slice %3 {offsets = [2, 0], sizes = [1, 128], strides = [1, 1]} : vector<3x128xf32> to vector<1x128xf32>
    %8 = vector.extract_strided_slice %3 {offsets = [1, 0], sizes = [1, 128], strides = [1, 1]} : vector<3x128xf32> to vector<1x128xf32>
    %9 = math.absf %6 : vector<8x128xf32>
    %cst_5 = arith.constant 3.000000e+18 : f32
    %10 = vector.broadcast %cst_5 : f32 to vector<8x128xf32>
    %11 = arith.minimumf %9, %10 : vector<8x128xf32>
    %12 = arith.mulf %11, %11 : vector<8x128xf32>
    %cst_6 = arith.constant 1.000000e+00 : f32
    %13 = vector.broadcast %cst_6 : f32 to vector<8x128xf32>
    %14 = arith.addf %12, %13 : vector<8x128xf32>
    %15 = math.sqrt %14 : vector<8x128xf32>
    %16 = arith.addf %9, %15 : vector<8x128xf32>
    %17 = math.log %16 : vector<8x128xf32>
    %cst_7 = arith.constant 0.000000e+00 : f32
    %18 = vector.broadcast %cst_7 : f32 to vector<8x128xf32>
    %19 = arith.cmpf oge, %6, %18 : vector<8x128xf32>
    %cst_8 = arith.constant 0.000000e+00 : f32
    %20 = vector.broadcast %cst_8 : f32 to vector<8x128xf32>
    %21 = arith.subf %20, %17 : vector<8x128xf32>
    %22 = arith.select %19, %17, %21 : vector<8x128xi1>, vector<8x128xf32>
    %23 = vector.broadcast %8 : vector<1x128xf32> to vector<8x128xf32>
    %24 = arith.mulf %23, %22 : vector<8x128xf32>
    %25 = vector.broadcast %7 : vector<1x128xf32> to vector<8x128xf32>
    %26 = arith.addf %25, %24 : vector<8x128xf32>
    %27 = math.exp %26 : vector<8x128xf32>
    %cst_9 = arith.constant 0.000000e+00 : f32
    %28 = vector.broadcast %cst_9 : f32 to vector<8x128xf32>
    %29 = arith.subf %28, %26 : vector<8x128xf32>
    %30 = math.exp %29 : vector<8x128xf32>
    %31 = arith.subf %27, %30 : vector<8x128xf32>
    %cst_10 = arith.constant 5.000000e-01 : f32
    %32 = vector.broadcast %cst_10 : f32 to vector<8x128xf32>
    %33 = arith.mulf %32, %31 : vector<8x128xf32>
    %c0_11 = arith.constant 0 : index
    %c0_12 = arith.constant 0 : index
    %34 = vector.load %arg4[%c0_11, %c0_12] : memref<128x16xf32, #tpu.memory_space<vmem>>, vector<128x16xf32>
    %cst_13 = arith.constant dense<0.000000e+00> : vector<8x16xf32>
    %35 = tpu.matmul %33, %34, %cst_13 {dimension_numbers = #tpu.dot_dimension_numbers<[1], [0], [0], [1], [0, 0, 1, 1], [], []>} : vector<8x128xf32>, vector<128x16xf32>, vector<8x16xf32> -> vector<8x16xf32>
    %c0_14 = arith.constant 0 : index
    %c0_15 = arith.constant 0 : index
    %36 = vector.load %arg5[%c0_14, %c0_15] : memref<1x16xf32, #tpu.memory_space<vmem>>, vector<1x16xf32>
    %37 = vector.broadcast %36 : vector<1x16xf32> to vector<8x16xf32>
    %38 = arith.addf %35, %37 : vector<8x16xf32>
    %c0_16 = arith.constant 0 : index
    %c0_17 = arith.constant 0 : index
    %39 = vector.load %arg6[%c0_16, %c0_17] : memref<8x16xf32, #tpu.memory_space<vmem>>, vector<8x16xf32>
    tpu.vector_store %arg6[%c0_16, %c0_17], %38 {strides = array<i32>} : memref<8x16xf32, #tpu.memory_space<vmem>>, vector<8x16xf32>,
    return
  }
  func.func @transform_0(%arg0: i32) -> (i32, i32) {
    %c0_i32 = arith.constant 0 : i32
    %c0_i32_0 = arith.constant 0 : i32
    return %arg0, %c0_i32 : i32, i32
  }
  func.func @transform_1(%arg0: i32) -> (i32, i32) {
    %c0_i32 = arith.constant 0 : i32
    %c0_i32_0 = arith.constant 0 : i32
    %c0_i32_1 = arith.constant 0 : i32
    return %c0_i32, %c0_i32_0 : i32, i32
  }
  func.func @transform_2(%arg0: i32) -> (i32, i32) {
    %c0_i32 = arith.constant 0 : i32
    %c0_i32_0 = arith.constant 0 : i32
    %c0_i32_1 = arith.constant 0 : i32
    return %c0_i32, %c0_i32_0 : i32, i32
  }
  func.func @transform_3(%arg0: i32) -> (i32, i32) {
    %c0_i32 = arith.constant 0 : i32
    %c0_i32_0 = arith.constant 0 : i32
    %c0_i32_1 = arith.constant 0 : i32
    return %c0_i32, %c0_i32_0 : i32, i32
  }
  func.func @transform_4(%arg0: i32) -> (i32, i32) {
    %c0_i32 = arith.constant 0 : i32
    %c0_i32_0 = arith.constant 0 : i32
    %c0_i32_1 = arith.constant 0 : i32
    return %c0_i32, %c0_i32_0 : i32, i32
  }
  func.func @transform_5(%arg0: i32) -> (i32, i32) {
    %c0_i32 = arith.constant 0 : i32
    %c0_i32_0 = arith.constant 0 : i32
    return %arg0, %c0_i32 : i32, i32
  }
}

</mosaic_0001>

<llo_original>
// kernel: tpu_custom_call.1
$region0: #{tpu_custom_call.1}
  #allocation0 [shape = 'u32[]', space=smem, size = 0x4, offset = 0x4, fixed_abs, tag = 'smem constant byte address 0x4 - core index']
  #allocation1 [shape = 'u32[144,128]{1,0:T(1,128)}', space=vmem, size = 0x12000, scoped, tag = 'internal scratch']
  %s0 = inlined_call_operand.vmem [shape: f32[8,16], index: 0, kind: input, shape index: {}]
  %s1 = inlined_call_operand.vmem [shape: f32[16,128], index: 1, kind: input, shape index: {}]
  %s2 = inlined_call_operand.vmem [shape: f32[3,128], index: 2, kind: input, shape index: {}]
  %s3 = inlined_call_operand.vmem [shape: f32[128,16], index: 3, kind: input, shape index: {}]
  %s4 = inlined_call_operand.vmem [shape: f32[1,16], index: 4, kind: input, shape index: {}]
  %s5 = inlined_call_operand.hbm [shape: f32[8,16], index: 5, kind: output, shape index: {}]
  %s6 = sld [smem:[#allocation0]]
  $region30: #{tpu_custom_call.1} parent=0
    _
  %s8 = ssub.s32 1, %s6
  %s9 = scalar_select 0, %s8, %s6
  $region1: #{tpu_custom_call.1} parent=0
    #allocation2 [shape = 'u8[4096]{0}', space=vmem, size = 0x1000, scoped, tag = 'output window, operand 0, single buffered']
    #allocation3 [shape = 's32[1]{0}', space=sflag, size = 0x4, scoped, tag = 'scoped memory for tpu_custom_call.1']
    %10 = vsyncpa [#allocation3], 0
    // Predicated region
    $region2: #{tpu_custom_call.1} parent=1 // pred_check
      _
    $region3: #{tpu_custom_call.1} parent=1 // pred_check_branch
      %12 = sbr.rel (0) target = $region5
    $region4: #{tpu_custom_call.1} parent=1 // pred_region
      _
    $region5: #{tpu_custom_call.1} parent=1 // pred_fallthru
      _
    // Predicated region
    $region6: #{tpu_custom_call.1} parent=1 // pred_check
      _
    $region7: #{tpu_custom_call.1} parent=1 // pred_check_branch
      %14 = sbr.rel (0) target = $region9
    $region8: #{tpu_custom_call.1} parent=1 // pred_region
      _
    $region9: #{tpu_custom_call.1} parent=1 // pred_fallthru
      _
    // Predicated region
    $region10: #{tpu_custom_call.1} parent=1 // pred_check
      _
    $region11: #{tpu_custom_call.1} parent=1 // pred_check_branch
      %16 = sbr.rel (0) target = $region13
    $region12: #{tpu_custom_call.1} parent=1 // pred_region
      _
    $region13: #{tpu_custom_call.1} parent=1 // pred_fallthru
      _
    // Predicated region
    $region14: #{tpu_custom_call.1} parent=1 // pred_check
      _
    $region15: #{tpu_custom_call.1} parent=1 // pred_check_branch
      %18 = sbr.rel (0) target = $region17
    $region16: #{tpu_custom_call.1} parent=1 // pred_region
      _
    $region17: #{tpu_custom_call.1} parent=1 // pred_fallthru
      _
    // Predicated region
    $region18: #{tpu_custom_call.1} parent=1 // pred_check
      _
    $region19: #{tpu_custom_call.1} parent=1 // pred_check_branch
      %20 = sbr.rel (0) target = $region21
    $region20: #{tpu_custom_call.1} parent=1 // pred_region
      _
    $region21: #{tpu_custom_call.1} parent=1 // pred_fallthru
      _
    %v21 = vld [vmem:[%s0] sm:$0xff]
    %v22 = vld [vmem:[%s1] sm:$0xff]
    %v23 = vld [vmem:[%s1 + $0x8] sm:$0xff]
    %v24 = vld [vmem:[%s2] sm:$0x7]
    %v25 = vlaneseq
    %v26 = vshrl.u32 %v25, 7
    %v27 = vsub.s32 0, %v26
    %v28 = vrot.slane %v24, %v27
    %vm29 = vcmask 130048
    %v31 = vsel %vm29, %v21, 0
    %33 = vmatprep.subr.mxu0 0.0
    %34 = vmatpush1.msra.mxu0 %v22
    %35 = vmatprep.subr.mxu0 0.0
    %36 = vmatpush1.msra.mxu0 %v23
    %37 = vmatprep.subr.mxu0 0.0
    %38 = vmatpush1.msra.mxu0 0.0
    %39 = vmatprep.subr.mxu0 0.0
    %40 = vmatpush1.msra.mxu0 0.0
    %41 = vmatprep.subr.mxu0 0.0
    %42 = vmatpush1.msra.mxu0 0.0
    %43 = vmatprep.subr.mxu0 0.0
    %44 = vmatpush1.msra.mxu0 0.0
    %45 = vmatprep.subr.mxu0 0.0
    %46 = vmatpush1.msra.mxu0 0.0
    %47 = vmatprep.subr.mxu0 0.0
    %48 = vmatpush1.msra.mxu0 0.0
    %49 = vmatprep.subr.mxu0 0.0
    %50 = vmatpush1.msra.mxu0 0.0
    %51 = vmatprep.subr.mxu0 0.0
    %52 = vmatpush1.msra.mxu0 0.0
    %53 = vmatprep.subr.mxu0 0.0
    %54 = vmatpush1.msra.mxu0 0.0
    %55 = vmatprep.subr.mxu0 0.0
    %56 = vmatpush1.msra.mxu0 0.0
    %57 = vmatprep.subr.mxu0 0.0
    %58 = vmatpush1.msra.mxu0 0.0
    %59 = vmatprep.subr.mxu0 0.0
    %60 = vmatpush1.msra.mxu0 0.0
    %61 = vmatprep.subr.mxu0 0.0
    %62 = vmatpush1.msra.mxu0 0.0
    %63 = vmatprep.subr.mxu0 0.0
    %64 = vmatpush1.msra.mxu0 0.0
    %65 = vmatprep.subr.mxu0 0.0
    %66 = vmatpush1.msra.mxu0 0.0
    %67 = vmatprep.subr.mxu0 0.0
    %68 = vmatpush1.msra.mxu0 0.0
    %69 = vmatprep.subr.mxu0 0.0
    %70 = vmatpush1.msra.mxu0 0.0
    %71 = vmatprep.subr.mxu0 0.0
    %72 = vmatpush1.msra.mxu0 0.0
    %73 = vmatprep.subr.mxu0 0.0
    %74 = vmatpush1.msra.mxu0 0.0
    %75 = vmatprep.subr.mxu0 0.0
    %76 = vmatpush1.msra.mxu0 0.0
    %77 = vmatprep.subr.mxu0 0.0
    %78 = vmatpush1.msra.mxu0 0.0
    %79 = vmatprep.subr.mxu0 0.0
    %80 = vmatpush1.msra.mxu0 0.0
    %81 = vmatprep.subr.mxu0 0.0
    %82 = vmatpush1.msra.mxu0 0.0
    %83 = vmatprep.subr.mxu0 0.0
    %84 = vmatpush1.msra.mxu0 0.0
    %85 = vmatprep.subr.mxu0 0.0
    %86 = vmatpush1.msra.mxu0 0.0
    %87 = vmatprep.subr.mxu0 0.0
    %88 = vmatpush1.msra.mxu0 0.0
    %89 = vmatprep.subr.mxu0 0.0
    %90 = vmatpush1.msra.mxu0 0.0
    %91 = vmatprep.subr.mxu0 0.0
    %92 = vmatpush1.msra.mxu0 0.0
    %93 = vmatprep.subr.mxu0 0.0
    %94 = vmatpush1.msra.mxu0 0.0
    %95 = vmatprep.subr.mxu0 0.0
    %96 = vmatpush1.msra.mxu0 0.0
    %97 = vmatprep.mubr.f32.mxu0 0.0
    %98 = vmatmul.mubr.f32.gmra.mrb[0].mxu0 %v31
    %v99 = vpop.f32.mrb[0].mxu0
    %v100 = vadd.f32 %v28, %v99
    %v101 = vpop.f32.mrb[0].mxu0
    %102 = vdwg.mxu0
    %v103 = vand.u32 2147483647, %v100
    %v104 = vmin.f32 %v103, 3e+18
    %v105 = vmul.f32 %v104, %v104
    %v106 = vadd.f32 %v105, 1.0
    %v107 = vrsqrt.pop %v106
    %v108 = vmul.f32 %v106, %v107
    %vm109 = vcmp.eq.f32.partialorder %v106, inf
    %v110 = vsel %vm109, %v106, %v108
    %vm111 = vcmp.eq.f32.partialorder %v106, 0.0
    %v112 = vand.u32 %v106, 2147483648
    %v113 = vsel %vm111, %v112, %v110
    %v114 = vadd.f32 %v103, %v113
    %v115 = vlog2.pop %v114
    %v116 = vmul.f32 %v115, 0.6931472
    %vm117 = vcmp.ge.f32.partialorder %v100, 0.0
    %v118 = vsub.f32 0.0, %v116
    %v119 = vsel %vm117, %v116, %v118
    %v120 = vlaneseq
    %v121 = vshrl.u32 %v120, 7
    %v122 = vsub.s32 1, %v121
    %v123 = vrot.slane %v24, %v122
    %v124 = vmul.f32 %v123, %v119
    %v125 = vlaneseq
    %v126 = vshrl.u32 %v125, 7
    %v127 = vsub.s32 2, %v126
    %v128 = vrot.slane %v24, %v127
    %v129 = vadd.f32 %v128, %v124
    %v130 = vmul.f32 %v129, 1.442695
    %v131 = vpow.pop %v130
    %v132 = vsub.f32 0.0, %v129
    %v133 = vmul.f32 %v132, 1.442695
    %v134 = vpow.pop %v133
    %v135 = vsub.f32 %v131, %v134
    %v136 = vmul.f32 %v135, 0.5
    %v137 = vld [vmem:[%s3] sm:$0xff]
    %v138 = vld [vmem:[%s3 + $0x8] sm:$0xff]
    %v139 = vld [vmem:[%s3 + $0x10] sm:$0xff]
    %v140 = vld [vmem:[%s3 + $0x18] sm:$0xff]
    %v141 = vld [vmem:[%s3 + $0x20] sm:$0xff]
    %v142 = vld [vmem:[%s3 + $0x28] sm:$0xff]
    %v143 = vld [vmem:[%s3 + $0x30] sm:$0xff]
    %v144 = vld [vmem:[%s3 + $0x38] sm:$0xff]
    %v145 = vld [vmem:[%s3 + $0x40] sm:$0xff]
    %v146 = vld [vmem:[%s3 + $0x48] sm:$0xff]
    %v147 = vld [vmem:[%s3 + $0x50] sm:$0xff]
    %v148 = vld [vmem:[%s3 + $0x58] sm:$0xff]
    %v149 = vld [vmem:[%s3 + $0x60] sm:$0xff]
    %v150 = vld [vmem:[%s3 + $0x68] sm:$0xff]
    %v151 = vld [vmem:[%s3 + $0x70] sm:$0xff]
    %v152 = vld [vmem:[%s3 + $0x78] sm:$0xff]
    %v153 = vld [vmem:[%s4] sm:$0x1]
    %v155 = vlaneseq
    %v156 = vshrl.u32 %v155, 7
    %v157 = vsub.s32 0, %v156
    %v158 = vrot.slane %v153, %v157
    %160 = vmatprep.subr.mxu0 0.0
    %161 = vmatpush1.msra.mxu0 %v137
    %162 = vmatprep.subr.mxu0 0.0
    %163 = vmatpush1.msra.mxu0 %v138
    %164 = vmatprep.subr.mxu0 0.0
    %165 = vmatpush1.msra.mxu0 %v139
    %166 = vmatprep.subr.mxu0 0.0
    %167 = vmatpush1.msra.mxu0 %v140
    %168 = vmatprep.subr.mxu0 0.0
    %169 = vmatpush1.msra.mxu0 %v141
    %170 = vmatprep.subr.mxu0 0.0
    %171 = vmatpush1.msra.mxu0 %v142
    %172 = vmatprep.subr.mxu0 0.0
    %173 = vmatpush1.msra.mxu0 %v143
    %174 = vmatprep.subr.mxu0 0.0
    %175 = vmatpush1.msra.mxu0 %v144
    %176 = vmatprep.subr.mxu0 0.0
    %177 = vmatpush1.msra.mxu0 %v145
    %178 = vmatprep.subr.mxu0 0.0
    %179 = vmatpush1.msra.mxu0 %v146
    %180 = vmatprep.subr.mxu0 0.0
    %181 = vmatpush1.msra.mxu0 %v147
    %182 = vmatprep.subr.mxu0 0.0
    %183 = vmatpush1.msra.mxu0 %v148
    %184 = vmatprep.subr.mxu0 0.0
    %185 = vmatpush1.msra.mxu0 %v149
    %186 = vmatprep.subr.mxu0 0.0
    %187 = vmatpush1.msra.mxu0 %v150
    %188 = vmatprep.subr.mxu0 0.0
    %189 = vmatpush1.msra.mxu0 %v151
    %190 = vmatprep.subr.mxu0 0.0
    %191 = vmatpush1.msra.mxu0 %v152
    %192 = vmatprep.subr.mxu0 0.0
    %193 = vmatpush1.msra.mxu0 0.0
    %194 = vmatprep.subr.mxu0 0.0
    %195 = vmatpush1.msra.mxu0 0.0
    %196 = vmatprep.subr.mxu0 0.0
    %197 = vmatpush1.msra.mxu0 0.0
    %198 = vmatprep.subr.mxu0 0.0
    %199 = vmatpush1.msra.mxu0 0.0
    %200 = vmatprep.subr.mxu0 0.0
    %201 = vmatpush1.msra.mxu0 0.0
    %202 = vmatprep.subr.mxu0 0.0
    %203 = vmatpush1.msra.mxu0 0.0
    %204 = vmatprep.subr.mxu0 0.0
    %205 = vmatpush1.msra.mxu0 0.0
    %206 = vmatprep.subr.mxu0 0.0
    %207 = vmatpush1.msra.mxu0 0.0
    %208 = vmatprep.subr.mxu0 0.0
    %209 = vmatpush1.msra.mxu0 0.0
    %210 = vmatprep.subr.mxu0 0.0
    %211 = vmatpush1.msra.mxu0 0.0
    %212 = vmatprep.subr.mxu0 0.0
    %213 = vmatpush1.msra.mxu0 0.0
    %214 = vmatprep.subr.mxu0 0.0
    %215 = vmatpush1.msra.mxu0 0.0
    %216 = vmatprep.subr.mxu0 0.0
    %217 = vmatpush1.msra.mxu0 0.0
    %218 = vmatprep.subr.mxu0 0.0
    %219 = vmatpush1.msra.mxu0 0.0
    %220 = vmatprep.subr.mxu0 0.0
    %221 = vmatpush1.msra.mxu0 0.0
    %222 = vmatprep.subr.mxu0 0.0
    %223 = vmatpush1.msra.mxu0 0.0
    %224 = vmatprep.mubr.f32.mxu0 0.0
    %225 = vmatmul.mubr.f32.gmra.mrb[0].mxu0 %v136
    %v226 = vpop.f32.mrb[0].mxu0
    %v227 = vadd.f32 %v158, %v226
    %v228 = vpop.f32.mrb[0].mxu0
    %229 = vdwg.mxu0
    %230 = vst.msk [vmem:[#allocation2] sm:$0xff] %vm29, %v227
    // Predicated region
    $region22: #{tpu_custom_call.1} parent=1 // pred_check
      _
    $region23: #{tpu_custom_call.1} parent=1 // pred_check_branch
      %232 = sbr.rel (0) target = $region25
    $region24: #{tpu_custom_call.1} parent=1 // pred_region
      %s234 = ssub.s32 128, 128
      %235 = vsyncadd [#allocation3], %s234
      %s237 = sshll.u32 [#allocation2], 4
      %s238 = int_to_ptr.vmem [resolvable:$true] %s237
      %240 = dma.vmem_to_hbm [thread:$0]  %s238, 128, %s5, [#allocation3]
    $region25: #{tpu_custom_call.1} parent=1 // pred_fallthru
      _
    // Predicated region
    $region26: #{tpu_custom_call.1} parent=1 // pred_check
      _
    $region27: #{tpu_custom_call.1} parent=1 // pred_check_branch
      %242 = sbr.rel (0) target = $region29
    $region28: #{tpu_custom_call.1} parent=1 // pred_region
      %243 = dma.done [#allocation3], 128
    $region29: #{tpu_custom_call.1} parent=1 // pred_fallthru
      _
    %244 = vsyncpa [#allocation3], 1

</llo_original>
